<compile_context>
chip_gen: v6e
topology: v6e:2x2x1
jax: 0.10.0
libtpu: 0.0.40
codegen_flags: <defaults>
</compile_context>

<pallas_src>
import numpy as np

import jax
import jax.numpy as jnp
from jax.experimental import pallas as pl
from jax.experimental.pallas import tpu as pltpu

PAD = 128
# layer i maps DIMS[i] -> DIMS[i+1]
DIMS = [3, 128, 64, 32, 16, 32, 64, 128, 3]
N_LAYERS = len(DIMS) - 1  # 8 Linear layers
IN_F = DIMS[0]
OUT_F = DIMS[-1]


# ---------------------------------------------------------------------------
# Kernel
# ---------------------------------------------------------------------------
def _autoenc_kernel(x_ref, w_ref, b_ref, o_ref):
    """x_ref: (tb, 3) f32; w_ref: (8, 128, 128) bf16 (zero-padded);
    b_ref: (8, 1, 128) f32 (zero-padded); o_ref: (tb, 3) f32."""
    # Quantize the input to bf16 (matches the MXU operand quantization of the
    # other layers), then compute layer 0 (3 -> 128, K=3) with three VPU
    # broadcast multiplies in f32.  This avoids any 128-lane padding of the
    # activation (no VMEM scratch, no zero-fill store pass) and keeps the
    # padded lanes exactly zero via the zero-padded weight/bias slabs.
    x_q = x_ref[...].astype(jnp.bfloat16)               # (tb, 3)
    w0 = w_ref[0]                                        # (128, 128) bf16

    acc = b_ref[0]                                       # (1, 128) f32, bcast
    for c in range(IN_F):
        acc = acc + (x_q[:, c:c + 1].astype(jnp.float32) *
                     w0[c:c + 1, :].astype(jnp.float32))  # (tb, 128) f32
    h = jnp.maximum(acc, 0.0).astype(jnp.bfloat16)       # bf16 inter-layer act

    # Layers 1..6: 128x128 MXU matmuls, f32 accumulation, f32 epilogue
    # (v5e-safe), bf16 activation fed straight to the next matmul.
    for i in range(1, N_LAYERS - 1):
        acc = jnp.dot(h, w_ref[i], preferred_element_type=jnp.float32)
        h = jnp.maximum(acc + b_ref[i], 0.0).astype(jnp.bfloat16)

    # Last layer (128 -> 3): no ReLU.
    acc = jnp.dot(h, w_ref[N_LAYERS - 1], preferred_element_type=jnp.float32)
    out = acc + b_ref[N_LAYERS - 1]                      # (tb, 128) f32

    # TODO(synk): nn.Dropout(0.2) is identity at inference; the stochastic
    # training-mode mask is not applied here.

    o_ref[...] = out[:, 0:OUT_F].astype(o_ref.dtype)     # narrow (masked) store


# Module-level index maps (stable function identities -> better compile cache).
def _x_index_map(i):
    return (i, 0)


def _slab_index_map(i):
    return (0, 0, 0)


def _o_index_map(i):
    return (i, 0)


# ---------------------------------------------------------------------------
# Wrapper
# ---------------------------------------------------------------------------
def _round_up(n, m):
    return -(-n // m) * m


def _choose_tile_b(B, *, max_tile=2048):
    """Batch tile: big enough to amortize the ~0.35us/step pipeline overhead,
    capped at a VMEM-safe 2048 rows (~11 MiB live at f32/bf16 widths, fine for
    v7x's 64 MiB physical / 32 MiB scoped default), and — whenever B allows —
    giving >= 2 blocks so the "parallel" axis shards across v7x's 2 cores."""
    if B <= 8:
        return 8
    half = _round_up((B + 1) // 2, 8)          # ceil(B/2), 8-sublane aligned
    return min(max_tile, max(8, half))


def pack_params(weights, biases):
    """One-time packing (hoisted out of the forward path): all 8 layers into a
    single (8,128,128) bf16 weight slab and a (8,1,128) f32 bias slab, each
    zero-padded so the unused lanes/rows contribute exactly zero."""
    w_stack = np.zeros((N_LAYERS, PAD, PAD), np.float32)
    b_stack = np.zeros((N_LAYERS, 1, PAD), np.float32)
    for i in range(N_LAYERS):
        w_stack[i, :DIMS[i], :DIMS[i + 1]] = np.asarray(weights[i], np.float32)
        b_stack[i, 0, :DIMS[i + 1]] = np.asarray(biases[i], np.float32)
    return (jnp.asarray(w_stack, jnp.bfloat16),
            jnp.asarray(b_stack, jnp.float32))


def complex_autoencoder_forward(x, w_stack, b_stack, *, tile_b=None,
                                vmem_limit_bytes=32 * 1024 * 1024):
    """x: (B, 3) float. w_stack: (8,128,128) bf16; b_stack: (8,1,128) f32
    (from pack_params). Returns (B, 3) float32."""
    B, F = x.shape
    assert F == IN_F
    x = x.astype(jnp.float32)

    if tile_b is None:
        tile_b = _choose_tile_b(B)
    tile_b = max(8, _round_up(tile_b, 8))
    n_blocks = pl.cdiv(B, tile_b)

    return pl.pallas_call(
        _autoenc_kernel,
        # No wrapper-side batch padding: Pallas masks the partial tail block
        # (tail rows read unspecified values but their stores are masked).
        out_shape=jax.ShapeDtypeStruct((B, OUT_F), jnp.float32),
        grid_spec=pltpu.PrefetchScalarGridSpec(
            num_scalar_prefetch=0,
            grid=(n_blocks,),
            in_specs=[
                # Narrow input: last dim equals the full array dim -> legal.
                pl.BlockSpec((tile_b, IN_F), _x_index_map),
                # Constant index maps: slabs fetched once, stay resident.
                pl.BlockSpec((N_LAYERS, PAD, PAD), _slab_index_map),
                pl.BlockSpec((N_LAYERS, 1, PAD), _slab_index_map),
            ],
            out_specs=pl.BlockSpec((tile_b, OUT_F), _o_index_map),
        ),
        compiler_params=pltpu.CompilerParams(
            dimension_semantics=("parallel",),
            vmem_limit_bytes=vmem_limit_bytes),
    )(x, w_stack, b_stack)


# ---------------------------------------------------------------------------
# Params / reference / checks
# ---------------------------------------------------------------------------
def init_params(key):
    """Deterministic init mimicking torch.nn.Linear default
    (U(-k, k), k = 1/sqrt(fan_in)); weights stored as (in, out)."""
    weights, biases = [], []
    for i in range(N_LAYERS):
        fan_in, fan_out = DIMS[i], DIMS[i + 1]
        k = 1.0 / jnp.sqrt(jnp.float32(fan_in))
        key, kw, kb = jax.random.split(key, 3)
        weights.append(jax.random.uniform(kw, (fan_in, fan_out),
                                          jnp.float32, -k, k))
        biases.append(jax.random.uniform(kb, (fan_out,), jnp.float32, -k, k))
    return weights, biases


def reference_forward(x, weights, biases, matmul_dtype=jnp.float32):
    """Pure-JAX reference; matmul_dtype=bfloat16 reproduces the kernel's
    quantization points (f32 accumulation either way)."""
    h = x.astype(jnp.float32)
    for i in range(N_LAYERS):
        h = jnp.dot(h.astype(matmul_dtype), weights[i].astype(matmul_dtype),
                    preferred_element_type=jnp.float32) + biases[i]
        if i < N_LAYERS - 1:
            h = jnp.maximum(h, 0.0)
    return h


def _check(x, weights, biases, w_stack, b_stack, tile_b=None):
    out = complex_autoencoder_forward(x, w_stack, b_stack, tile_b=tile_b)
    out = jax.block_until_ready(out)
    assert out.shape == (x.shape[0], OUT_F), out.shape
    assert bool(jnp.all(jnp.isfinite(out)))

    # Matched-precision reference (same bf16 operand quantization).
    ref_bf16 = reference_forward(x, weights, biases, matmul_dtype=jnp.bfloat16)
    assert jnp.allclose(out, ref_bf16, atol=2e-2, rtol=2e-2), (
        float(jnp.max(jnp.abs(out - ref_bf16))))

    # Loose check against the full-f32 module.
    ref_f32 = reference_forward(x, weights, biases, matmul_dtype=jnp.float32)
    assert jnp.allclose(out, ref_f32, atol=1e-1, rtol=1e-1), (
        float(jnp.max(jnp.abs(out - ref_f32))))


if __name__ == "__main__":
    key = jax.random.PRNGKey(0)
    key, kx1, kx2 = jax.random.split(key, 3)
    weights, biases = init_params(key)

    # Pack once, outside the per-call forward path.
    w_stack, b_stack = pack_params(weights, biases)

    # Tiny batch: single 8-row block.
    x_small = jax.random.normal(kx1, (8, IN_F), jnp.float32)
    _check(x_small, weights, biases, w_stack, b_stack)

    # Larger, non-multiple batch: 2-block parallel grid (megacore on v7x) with
    # a partial trailing block (Pallas-masked tail, no wrapper padding).
    x_large = jax.random.normal(kx2, (300, IN_F), jnp.float32)
    _check(x_large, weights, biases, w_stack, b_stack)

    print("KERNEL_OK")
</pallas_src>

<mosaic_0001>
module attributes {stable_mosaic.version = 11 : i64} {
  func.func @_autoenc_kernel(%arg0: i32, %arg1: memref<8x3xf32, #tpu.memory_space<vmem>>, %arg2: memref<8x128x128xbf16, #tpu.memory_space<vmem>>, %arg3: memref<8x1x128xf32, #tpu.memory_space<vmem>>, %arg4: memref<8x3xf32, #tpu.memory_space<vmem>>) attributes {dimension_semantics = [#tpu.dimension_semantics<parallel>], iteration_bounds = array<i64: 1>, scalar_prefetch = 0 : i64, scratch_operands = 0 : i64, tpu.core_type = #tpu.core_type<tc>, window_params = [{transform_indices = @transform_0, window_bounds = array<i64: 8, 3>}, {pipeline_mode = #tpu.pipeline_mode<synchronous>, transform_indices = @transform_1, window_bounds = array<i64: 8, 128, 128>}, {pipeline_mode = #tpu.pipeline_mode<synchronous>, transform_indices = @transform_2, window_bounds = array<i64: 8, 1, 128>}, {transform_indices = @transform_3, window_bounds = array<i64: 8, 3>}]} {
    %c0 = arith.constant 0 : index
    %c0_0 = arith.constant 0 : index
    %0 = vector.load %arg1[%c0, %c0_0] : memref<8x3xf32, #tpu.memory_space<vmem>>, vector<8x3xf32>
    %1 = arith.truncf %0 : vector<8x3xf32> to vector<8x3xbf16>
    %c0_1 = arith.constant 0 : index
    %c0_2 = arith.constant 0 : index
    %c0_3 = arith.constant 0 : index
    %2 = vector.load %arg2[%c0_1, %c0_2, %c0_3] : memref<8x128x128xbf16, #tpu.memory_space<vmem>>, vector<1x128x128xbf16>
    %3 = vector.shape_cast %2 : vector<1x128x128xbf16> to vector<128x128xbf16>
    %c0_4 = arith.constant 0 : index
    %c0_5 = arith.constant 0 : index
    %c0_6 = arith.constant 0 : index
    %4 = vector.load %arg3[%c0_4, %c0_5, %c0_6] : memref<8x1x128xf32, #tpu.memory_space<vmem>>, vector<1x1x128xf32>
    %5 = vector.shape_cast %4 : vector<1x1x128xf32> to vector<1x128xf32>
    %6 = vector.extract_strided_slice %1 {offsets = [0, 0], sizes = [8, 1], strides = [1, 1]} : vector<8x3xbf16> to vector<8x1xbf16>
    %7 = arith.extf %6 : vector<8x1xbf16> to vector<8x1xf32>
    %8 = vector.extract_strided_slice %3 {offsets = [0, 0], sizes = [1, 128], strides = [1, 1]} : vector<128x128xbf16> to vector<1x128xbf16>
    %9 = arith.extf %8 : vector<1x128xbf16> to vector<1x128xf32>
    %10 = vector.broadcast %7 : vector<8x1xf32> to vector<8x128xf32>
    %11 = vector.broadcast %9 : vector<1x128xf32> to vector<8x128xf32>
    %12 = arith.mulf %10, %11 : vector<8x128xf32>
    %13 = vector.broadcast %5 : vector<1x128xf32> to vector<8x128xf32>
    %14 = arith.addf %13, %12 : vector<8x128xf32>
    %15 = vector.extract_strided_slice %1 {offsets = [0, 1], sizes = [8, 1], strides = [1, 1]} : vector<8x3xbf16> to vector<8x1xbf16>
    %16 = arith.extf %15 : vector<8x1xbf16> to vector<8x1xf32>
    %17 = vector.extract_strided_slice %3 {offsets = [1, 0], sizes = [1, 128], strides = [1, 1]} : vector<128x128xbf16> to vector<1x128xbf16>
    %18 = arith.extf %17 : vector<1x128xbf16> to vector<1x128xf32>
    %19 = vector.broadcast %16 : vector<8x1xf32> to vector<8x128xf32>
    %20 = vector.broadcast %18 : vector<1x128xf32> to vector<8x128xf32>
    %21 = arith.mulf %19, %20 : vector<8x128xf32>
    %22 = arith.addf %14, %21 : vector<8x128xf32>
    %23 = vector.extract_strided_slice %1 {offsets = [0, 2], sizes = [8, 1], strides = [1, 1]} : vector<8x3xbf16> to vector<8x1xbf16>
    %24 = arith.extf %23 : vector<8x1xbf16> to vector<8x1xf32>
    %25 = vector.extract_strided_slice %3 {offsets = [2, 0], sizes = [1, 128], strides = [1, 1]} : vector<128x128xbf16> to vector<1x128xbf16>
    %26 = arith.extf %25 : vector<1x128xbf16> to vector<1x128xf32>
    %27 = vector.broadcast %24 : vector<8x1xf32> to vector<8x128xf32>
    %28 = vector.broadcast %26 : vector<1x128xf32> to vector<8x128xf32>
    %29 = arith.mulf %27, %28 : vector<8x128xf32>
    %30 = arith.addf %22, %29 : vector<8x128xf32>
    %cst = arith.constant 0.000000e+00 : f32
    %31 = vector.broadcast %cst : f32 to vector<8x128xf32>
    %32 = arith.maximumf %30, %31 : vector<8x128xf32>
    %33 = arith.truncf %32 : vector<8x128xf32> to vector<8x128xbf16>
    %c1 = arith.constant 1 : index
    %c0_7 = arith.constant 0 : index
    %c0_8 = arith.constant 0 : index
    %34 = vector.load %arg2[%c1, %c0_7, %c0_8] : memref<8x128x128xbf16, #tpu.memory_space<vmem>>, vector<1x128x128xbf16>
    %35 = vector.shape_cast %34 : vector<1x128x128xbf16> to vector<128x128xbf16>
    %cst_9 = arith.constant dense<0.000000e+00> : vector<8x128xf32>
    %36 = tpu.matmul %33, %35, %cst_9 {dimension_numbers = #tpu.dot_dimension_numbers<[1], [0], [0], [1], [0, 0, 1, 1], [], []>} : vector<8x128xbf16>, vector<128x128xbf16>, vector<8x128xf32> -> vector<8x128xf32>
    %c1_10 = arith.constant 1 : index
    %c0_11 = arith.constant 0 : index
    %c0_12 = arith.constant 0 : index
    %37 = vector.load %arg3[%c1_10, %c0_11, %c0_12] : memref<8x1x128xf32, #tpu.memory_space<vmem>>, vector<1x1x128xf32>
    %38 = vector.shape_cast %37 : vector<1x1x128xf32> to vector<1x128xf32>
    %39 = vector.broadcast %38 : vector<1x128xf32> to vector<8x128xf32>
    %40 = arith.addf %36, %39 : vector<8x128xf32>
    %cst_13 = arith.constant 0.000000e+00 : f32
    %41 = vector.broadcast %cst_13 : f32 to vector<8x128xf32>
    %42 = arith.maximumf %40, %41 : vector<8x128xf32>
    %43 = arith.truncf %42 : vector<8x128xf32> to vector<8x128xbf16>
    %c2 = arith.constant 2 : index
    %c0_14 = arith.constant 0 : index
    %c0_15 = arith.constant 0 : index
    %44 = vector.load %arg2[%c2, %c0_14, %c0_15] : memref<8x128x128xbf16, #tpu.memory_space<vmem>>, vector<1x128x128xbf16>
    %45 = vector.shape_cast %44 : vector<1x128x128xbf16> to vector<128x128xbf16>
    %cst_16 = arith.constant dense<0.000000e+00> : vector<8x128xf32>
    %46 = tpu.matmul %43, %45, %cst_16 {dimension_numbers = #tpu.dot_dimension_numbers<[1], [0], [0], [1], [0, 0, 1, 1], [], []>} : vector<8x128xbf16>, vector<128x128xbf16>, vector<8x128xf32> -> vector<8x128xf32>
    %c2_17 = arith.constant 2 : index
    %c0_18 = arith.constant 0 : index
    %c0_19 = arith.constant 0 : index
    %47 = vector.load %arg3[%c2_17, %c0_18, %c0_19] : memref<8x1x128xf32, #tpu.memory_space<vmem>>, vector<1x1x128xf32>
    %48 = vector.shape_cast %47 : vector<1x1x128xf32> to vector<1x128xf32>
    %49 = vector.broadcast %48 : vector<1x128xf32> to vector<8x128xf32>
    %50 = arith.addf %46, %49 : vector<8x128xf32>
    %cst_20 = arith.constant 0.000000e+00 : f32
    %51 = vector.broadcast %cst_20 : f32 to vector<8x128xf32>
    %52 = arith.maximumf %50, %51 : vector<8x128xf32>
    %53 = arith.truncf %52 : vector<8x128xf32> to vector<8x128xbf16>
    %c3 = arith.constant 3 : index
    %c0_21 = arith.constant 0 : index
    %c0_22 = arith.constant 0 : index
    %54 = vector.load %arg2[%c3, %c0_21, %c0_22] : memref<8x128x128xbf16, #tpu.memory_space<vmem>>, vector<1x128x128xbf16>
    %55 = vector.shape_cast %54 : vector<1x128x128xbf16> to vector<128x128xbf16>
    %cst_23 = arith.constant dense<0.000000e+00> : vector<8x128xf32>
    %56 = tpu.matmul %53, %55, %cst_23 {dimension_numbers = #tpu.dot_dimension_numbers<[1], [0], [0], [1], [0, 0, 1, 1], [], []>} : vector<8x128xbf16>, vector<128x128xbf16>, vector<8x128xf32> -> vector<8x128xf32>
    %c3_24 = arith.constant 3 : index
    %c0_25 = arith.constant 0 : index
    %c0_26 = arith.constant 0 : index
    %57 = vector.load %arg3[%c3_24, %c0_25, %c0_26] : memref<8x1x128xf32, #tpu.memory_space<vmem>>, vector<1x1x128xf32>
    %58 = vector.shape_cast %57 : vector<1x1x128xf32> to vector<1x128xf32>
    %59 = vector.broadcast %58 : vector<1x128xf32> to vector<8x128xf32>
    %60 = arith.addf %56, %59 : vector<8x128xf32>
    %cst_27 = arith.constant 0.000000e+00 : f32
    %61 = vector.broadcast %cst_27 : f32 to vector<8x128xf32>
    %62 = arith.maximumf %60, %61 : vector<8x128xf32>
    %63 = arith.truncf %62 : vector<8x128xf32> to vector<8x128xbf16>
    %c4 = arith.constant 4 : index
    %c0_28 = arith.constant 0 : index
    %c0_29 = arith.constant 0 : index
    %64 = vector.load %arg2[%c4, %c0_28, %c0_29] : memref<8x128x128xbf16, #tpu.memory_space<vmem>>, vector<1x128x128xbf16>
    %65 = vector.shape_cast %64 : vector<1x128x128xbf16> to vector<128x128xbf16>
    %cst_30 = arith.constant dense<0.000000e+00> : vector<8x128xf32>
    %66 = tpu.matmul %63, %65, %cst_30 {dimension_numbers = #tpu.dot_dimension_numbers<[1], [0], [0], [1], [0, 0, 1, 1], [], []>} : vector<8x128xbf16>, vector<128x128xbf16>, vector<8x128xf32> -> vector<8x128xf32>
    %c4_31 = arith.constant 4 : index
    %c0_32 = arith.constant 0 : index
    %c0_33 = arith.constant 0 : index
    %67 = vector.load %arg3[%c4_31, %c0_32, %c0_33] : memref<8x1x128xf32, #tpu.memory_space<vmem>>, vector<1x1x128xf32>
    %68 = vector.shape_cast %67 : vector<1x1x128xf32> to vector<1x128xf32>
    %69 = vector.broadcast %68 : vector<1x128xf32> to vector<8x128xf32>
    %70 = arith.addf %66, %69 : vector<8x128xf32>
    %cst_34 = arith.constant 0.000000e+00 : f32
    %71 = vector.broadcast %cst_34 : f32 to vector<8x128xf32>
    %72 = arith.maximumf %70, %71 : vector<8x128xf32>
    %73 = arith.truncf %72 : vector<8x128xf32> to vector<8x128xbf16>
    %c5 = arith.constant 5 : index
    %c0_35 = arith.constant 0 : index
    %c0_36 = arith.constant 0 : index
    %74 = vector.load %arg2[%c5, %c0_35, %c0_36] : memref<8x128x128xbf16, #tpu.memory_space<vmem>>, vector<1x128x128xbf16>
    %75 = vector.shape_cast %74 : vector<1x128x128xbf16> to vector<128x128xbf16>
    %cst_37 = arith.constant dense<0.000000e+00> : vector<8x128xf32>
    %76 = tpu.matmul %73, %75, %cst_37 {dimension_numbers = #tpu.dot_dimension_numbers<[1], [0], [0], [1], [0, 0, 1, 1], [], []>} : vector<8x128xbf16>, vector<128x128xbf16>, vector<8x128xf32> -> vector<8x128xf32>
    %c5_38 = arith.constant 5 : index
    %c0_39 = arith.constant 0 : index
    %c0_40 = arith.constant 0 : index
    %77 = vector.load %arg3[%c5_38, %c0_39, %c0_40] : memref<8x1x128xf32, #tpu.memory_space<vmem>>, vector<1x1x128xf32>
    %78 = vector.shape_cast %77 : vector<1x1x128xf32> to vector<1x128xf32>
    %79 = vector.broadcast %78 : vector<1x128xf32> to vector<8x128xf32>
    %80 = arith.addf %76, %79 : vector<8x128xf32>
    %cst_41 = arith.constant 0.000000e+00 : f32
    %81 = vector.broadcast %cst_41 : f32 to vector<8x128xf32>
    %82 = arith.maximumf %80, %81 : vector<8x128xf32>
    %83 = arith.truncf %82 : vector<8x128xf32> to vector<8x128xbf16>
    %c6 = arith.constant 6 : index
    %c0_42 = arith.constant 0 : index
    %c0_43 = arith.constant 0 : index
    %84 = vector.load %arg2[%c6, %c0_42, %c0_43] : memref<8x128x128xbf16, #tpu.memory_space<vmem>>, vector<1x128x128xbf16>
    %85 = vector.shape_cast %84 : vector<1x128x128xbf16> to vector<128x128xbf16>
    %cst_44 = arith.constant dense<0.000000e+00> : vector<8x128xf32>
    %86 = tpu.matmul %83, %85, %cst_44 {dimension_numbers = #tpu.dot_dimension_numbers<[1], [0], [0], [1], [0, 0, 1, 1], [], []>} : vector<8x128xbf16>, vector<128x128xbf16>, vector<8x128xf32> -> vector<8x128xf32>
    %c6_45 = arith.constant 6 : index
    %c0_46 = arith.constant 0 : index
    %c0_47 = arith.constant 0 : index
    %87 = vector.load %arg3[%c6_45, %c0_46, %c0_47] : memref<8x1x128xf32, #tpu.memory_space<vmem>>, vector<1x1x128xf32>
    %88 = vector.shape_cast %87 : vector<1x1x128xf32> to vector<1x128xf32>
    %89 = vector.broadcast %88 : vector<1x128xf32> to vector<8x128xf32>
    %90 = arith.addf %86, %89 : vector<8x128xf32>
    %cst_48 = arith.constant 0.000000e+00 : f32
    %91 = vector.broadcast %cst_48 : f32 to vector<8x128xf32>
    %92 = arith.maximumf %90, %91 : vector<8x128xf32>
    %93 = arith.truncf %92 : vector<8x128xf32> to vector<8x128xbf16>
    %c7 = arith.constant 7 : index
    %c0_49 = arith.constant 0 : index
    %c0_50 = arith.constant 0 : index
    %94 = vector.load %arg2[%c7, %c0_49, %c0_50] : memref<8x128x128xbf16, #tpu.memory_space<vmem>>, vector<1x128x128xbf16>
    %95 = vector.shape_cast %94 : vector<1x128x128xbf16> to vector<128x128xbf16>
    %cst_51 = arith.constant dense<0.000000e+00> : vector<8x128xf32>
    %96 = tpu.matmul %93, %95, %cst_51 {dimension_numbers = #tpu.dot_dimension_numbers<[1], [0], [0], [1], [0, 0, 1, 1], [], []>} : vector<8x128xbf16>, vector<128x128xbf16>, vector<8x128xf32> -> vector<8x128xf32>
    %c7_52 = arith.constant 7 : index
    %c0_53 = arith.constant 0 : index
    %c0_54 = arith.constant 0 : index
    %97 = vector.load %arg3[%c7_52, %c0_53, %c0_54] : memref<8x1x128xf32, #tpu.memory_space<vmem>>, vector<1x1x128xf32>
    %98 = vector.shape_cast %97 : vector<1x1x128xf32> to vector<1x128xf32>
    %99 = vector.broadcast %98 : vector<1x128xf32> to vector<8x128xf32>
    %100 = arith.addf %96, %99 : vector<8x128xf32>
    %101 = vector.extract_strided_slice %100 {offsets = [0, 0], sizes = [8, 3], strides = [1, 1]} : vector<8x128xf32> to vector<8x3xf32>
    %c0_55 = arith.constant 0 : index
    %c0_56 = arith.constant 0 : index
    %102 = vector.load %arg4[%c0_55, %c0_56] : memref<8x3xf32, #tpu.memory_space<vmem>>, vector<8x3xf32>
    tpu.vector_store %arg4[%c0_55, %c0_56], %101 {strides = array<i32>} : memref<8x3xf32, #tpu.memory_space<vmem>>, vector<8x3xf32>,
    return
  }
  func.func @transform_0(%arg0: i32) -> (i32, i32) {
    %c0_i32 = arith.constant 0 : i32
    %c0_i32_0 = arith.constant 0 : i32
    return %arg0, %c0_i32 : i32, i32
  }
  func.func @transform_1(%arg0: i32) -> (i32, i32, i32) {
    %c0_i32 = arith.constant 0 : i32
    %c0_i32_0 = arith.constant 0 : i32
    %c0_i32_1 = arith.constant 0 : i32
    %c0_i32_2 = arith.constant 0 : i32
    return %c0_i32, %c0_i32_0, %c0_i32_1 : i32, i32, i32
  }
  func.func @transform_2(%arg0: i32) -> (i32, i32, i32) {
    %c0_i32 = arith.constant 0 : i32
    %c0_i32_0 = arith.constant 0 : i32
    %c0_i32_1 = arith.constant 0 : i32
    %c0_i32_2 = arith.constant 0 : i32
    return %c0_i32, %c0_i32_0, %c0_i32_1 : i32, i32, i32
  }
  func.func @transform_3(%arg0: i32) -> (i32, i32) {
    %c0_i32 = arith.constant 0 : i32
    %c0_i32_0 = arith.constant 0 : i32
    return %arg0, %c0_i32 : i32, i32
  }
}

</mosaic_0001>

<llo_original>
// kernel: tpu_custom_call.1
$region0: #{tpu_custom_call.1}
  #allocation0 [shape = 'u32[]', space=smem, size = 0x4, offset = 0x4, fixed_abs, tag = 'smem constant byte address 0x4 - core index']
  #allocation1 [shape = 'u32[144,128]{1,0:T(1,128)}', space=vmem, size = 0x12000, scoped, tag = 'internal scratch']
  %s0 = inlined_call_operand.vmem [shape: f32[8,3], index: 0, kind: input, shape index: {}]
  %s1 = inlined_call_operand.hbm [shape: bf16[8,128,128], index: 1, kind: input, shape index: {}]
  %s2 = inlined_call_operand.vmem [shape: f32[8,1,128], index: 2, kind: input, shape index: {}]
  %s3 = inlined_call_operand.vmem [shape: f32[8,3], index: 3, kind: output, shape index: {}]
  %s4 = sld [smem:[#allocation0]]
  $region26: #{tpu_custom_call.1} parent=0
    _
  %s6 = ssub.s32 1, %s4
  %s7 = scalar_select 0, %s6, %s4
  $region1: #{tpu_custom_call.1} parent=0
    #allocation2 [shape = 'u8[262144]{0}', space=vmem, size = 0x40000, scoped, tag = 'input window, operand 1, single buffered']
    #allocation3 [shape = 's32[1]{0}', space=sflag, size = 0x4, scoped, tag = 'scoped memory for tpu_custom_call.1']
    %8 = vsyncpa [#allocation3], 0
    // Predicated region
    $region2: #{tpu_custom_call.1} parent=1 // pred_check
      _
    $region3: #{tpu_custom_call.1} parent=1 // pred_check_branch
      %10 = sbr.rel (0) target = $region5
    $region4: #{tpu_custom_call.1} parent=1 // pred_region
      _
    $region5: #{tpu_custom_call.1} parent=1 // pred_fallthru
      _
    // Predicated region
    $region6: #{tpu_custom_call.1} parent=1 // pred_check
      _
    $region7: #{tpu_custom_call.1} parent=1 // pred_check_branch
      %12 = sbr.rel (0) target = $region9
    $region8: #{tpu_custom_call.1} parent=1 // pred_region
      %s14 = ssub.s32 8192, 8192
      %15 = vsyncadd [#allocation3], %s14
      %s16 = sshll.u32 [#allocation2], 4
      %s17 = int_to_ptr.vmem [resolvable:$true] %s16
      %22 = dma.hbm_to_vmem [thread:$0]  %s1, 8192, %s17, [#allocation3], 64, 64, 4
    $region9: #{tpu_custom_call.1} parent=1 // pred_fallthru
      _
    // Predicated region
    $region10: #{tpu_custom_call.1} parent=1 // pred_check
      _
    $region11: #{tpu_custom_call.1} parent=1 // pred_check_branch
      %24 = sbr.rel (0) target = $region13
    $region12: #{tpu_custom_call.1} parent=1 // pred_region
      _
    $region13: #{tpu_custom_call.1} parent=1 // pred_fallthru
      _
    // Predicated region
    $region14: #{tpu_custom_call.1} parent=1 // pred_check
      _
    $region15: #{tpu_custom_call.1} parent=1 // pred_check_branch
      %26 = sbr.rel (0) target = $region17
    $region16: #{tpu_custom_call.1} parent=1 // pred_region
      %27 = dma.done [#allocation3], 8192
    $region17: #{tpu_custom_call.1} parent=1 // pred_fallthru
      _
    %v29 = vld [vmem:[%s0] sm:$0xff]
    %v30 = vpack.c.bf16 %v29, %v29
    %v31 = vld [vmem:[#allocation2] sm:$0xf]
    %v32 = vld [vmem:[%s2] sm:$0x1]
    %v33 = vunpack.c.l.bf16 %v30
    %v34 = vunpack.c.l.bf16 %v31
    %36 = vset.pattern.permute.xlu0 0
    %37 = vperm.xlu0 %36, %v33
    %v38 = vpop.permute.xlu0 %37
    %v40 = vlaneseq
    %v41 = vshrl.u32 %v40, 7
    %v42 = vsub.s32 0, %v41
    %v43 = vrot.slane %v34, %v42
    %v44 = vmul.f32 %v38, %v43
    %v46 = vlaneseq
    %v47 = vshrl.u32 %v46, 7
    %v48 = vsub.s32 0, %v47
    %v49 = vrot.slane %v32, %v48
    %v51 = vadd.f32 %v49, %v44
    %52 = vset.pattern.permute.xlu0 1
    %53 = vperm.xlu0 %52, %v33
    %v54 = vpop.permute.xlu0 %53
    %v56 = vlaneseq
    %v57 = vshrl.u32 %v56, 7
    %v58 = vsub.s32 1, %v57
    %v59 = vrot.slane %v34, %v58
    %v60 = vmul.f32 %v54, %v59
    %v61 = vadd.f32 %v51, %v60
    %62 = vset.pattern.permute.xlu0 2
    %63 = vperm.xlu0 %62, %v33
    %v64 = vpop.permute.xlu0 %63
    %v66 = vlaneseq
    %v67 = vshrl.u32 %v66, 7
    %v68 = vsub.s32 2, %v67
    %v69 = vrot.slane %v34, %v68
    %v70 = vmul.f32 %v64, %v69
    %v71 = vadd.f32 %v61, %v70
    %v72 = vmax.f32 %v71, 0.0
    %v73 = vpack.c.bf16 %v72, %v72
    %s74 = scalar_lea.vmem [#allocation2], 64
    %v75 = vld [vmem:[%s74] sm:$0xf]
    %v76 = vld [vmem:[%s74 + $0x4] sm:$0xf]
    %v77 = vld [vmem:[%s74 + $0x8] sm:$0xf]
    %v78 = vld [vmem:[%s74 + $0xc] sm:$0xf]
    %v79 = vld [vmem:[%s74 + $0x10] sm:$0xf]
    %v80 = vld [vmem:[%s74 + $0x14] sm:$0xf]
    %v81 = vld [vmem:[%s74 + $0x18] sm:$0xf]
    %v82 = vld [vmem:[%s74 + $0x1c] sm:$0xf]
    %v83 = vld [vmem:[%s74 + $0x20] sm:$0xf]
    %v84 = vld [vmem:[%s74 + $0x24] sm:$0xf]
    %v85 = vld [vmem:[%s74 + $0x28] sm:$0xf]
    %v86 = vld [vmem:[%s74 + $0x2c] sm:$0xf]
    %v87 = vld [vmem:[%s74 + $0x30] sm:$0xf]
    %v88 = vld [vmem:[%s74 + $0x34] sm:$0xf]
    %v89 = vld [vmem:[%s74 + $0x38] sm:$0xf]
    %v90 = vld [vmem:[%s74 + $0x3c] sm:$0xf]
    %s91 = scalar_lea.vmem %s2, 1
    %v92 = vld [vmem:[%s91] sm:$0x1]
    %v94 = vlaneseq
    %v95 = vshrl.u32 %v94, 7
    %v96 = vsub.s32 0, %v95
    %v97 = vrot.slane %v92, %v96
    %v115 = vunpack.c.l.b16 %v75
    %v116 = vunpack.c.l.b16 %v76
    %v117 = vunpack.c.l.b16 %v77
    %v118 = vunpack.c.l.b16 %v78
    %v119 = vunpack.c.l.b16 %v79
    %v120 = vunpack.c.l.b16 %v80
    %v121 = vunpack.c.l.b16 %v81
    %v122 = vunpack.c.l.b16 %v82
    %v123 = vunpack.c.l.b16 %v83
    %v124 = vunpack.c.l.b16 %v84
    %v125 = vunpack.c.l.b16 %v85
    %v126 = vunpack.c.l.b16 %v86
    %v127 = vunpack.c.l.b16 %v87
    %v128 = vunpack.c.l.b16 %v88
    %v129 = vunpack.c.l.b16 %v89
    %v130 = vunpack.c.l.b16 %v90
    %v131 = vpack.c.b16 %v116, %v115
    %v132 = vpack.c.b16 %v118, %v117
    %v133 = vpack.c.b16 %v120, %v119
    %v134 = vpack.c.b16 %v122, %v121
    %v135 = vpack.c.b16 %v124, %v123
    %v136 = vpack.c.b16 %v126, %v125
    %v137 = vpack.c.b16 %v128, %v127
    %v138 = vpack.c.b16 %v130, %v129
    %147 = vmatprep.subr.bf16.mxu0 0
    %148 = vmatpush1.bf16.msra.mxu0 %v138
    %149 = vmatprep.subr.bf16.mxu0 0
    %150 = vmatpush1.bf16.msra.mxu0 %v137
    %151 = vmatprep.subr.bf16.mxu0 0
    %152 = vmatpush1.bf16.msra.mxu0 %v136
    %153 = vmatprep.subr.bf16.mxu0 0
    %154 = vmatpush1.bf16.msra.mxu0 %v135
    %155 = vmatprep.subr.bf16.mxu0 0
    %156 = vmatpush1.bf16.msra.mxu0 %v134
    %157 = vmatprep.subr.bf16.mxu0 0
    %158 = vmatpush1.bf16.msra.mxu0 %v133
    %159 = vmatprep.subr.bf16.mxu0 0
    %160 = vmatpush1.bf16.msra.mxu0 %v132
    %161 = vmatprep.subr.bf16.mxu0 0
    %162 = vmatpush1.bf16.msra.mxu0 %v131
    %163 = vmatprep.subr.bf16.mxu0 0
    %164 = vmatpush2.bf16.msra.mxu0 0
    %165 = vmatprep.subr.bf16.mxu0 0
    %166 = vmatpush2.bf16.msra.mxu0 0
    %167 = vmatprep.subr.bf16.mxu0 0
    %168 = vmatpush2.bf16.msra.mxu0 0
    %169 = vmatprep.subr.bf16.mxu0 0
    %170 = vmatpush2.bf16.msra.mxu0 0
    %171 = vmatprep.subr.bf16.mxu0 0
    %172 = vmatpush2.bf16.msra.mxu0 0
    %173 = vmatprep.subr.bf16.mxu0 0
    %174 = vmatpush2.bf16.msra.mxu0 0
    %175 = vmatprep.subr.bf16.mxu0 0
    %176 = vmatpush2.bf16.msra.mxu0 0
    %177 = vmatprep.subr.bf16.mxu0 0
    %178 = vmatpush2.bf16.msra.mxu0 0
    %179 = vmatprep.mubr.bf16.mxu0 0
    %180 = vmatmul.mubr.bf16.gmra.mxu0 %v73
    %v181 = vpop.f32.mrf.mxu0
    %v182 = vadd.f32 %v97, %v181
    %v183 = vpop.f32.mrf.mxu0
    %v184 = vpop.f32.mrf.mxu0
    %v185 = vpop.f32.mrf.mxu0
    %186 = vdwg.mxu0
    %v187 = vmax.f32 %v182, 0.0
    %v188 = vpack.c.bf16 %v187, %v187
    %s189 = scalar_lea.vmem [#allocation2], 128
    %v190 = vld [vmem:[%s189] sm:$0xf]
    %v191 = vld [vmem:[%s189 + $0x4] sm:$0xf]
    %v192 = vld [vmem:[%s189 + $0x8] sm:$0xf]
    %v193 = vld [vmem:[%s189 + $0xc] sm:$0xf]
    %v194 = vld [vmem:[%s189 + $0x10] sm:$0xf]
    %v195 = vld [vmem:[%s189 + $0x14] sm:$0xf]
    %v196 = vld [vmem:[%s189 + $0x18] sm:$0xf]
    %v197 = vld [vmem:[%s189 + $0x1c] sm:$0xf]
    %v198 = vld [vmem:[%s189 + $0x20] sm:$0xf]
    %v199 = vld [vmem:[%s189 + $0x24] sm:$0xf]
    %v200 = vld [vmem:[%s189 + $0x28] sm:$0xf]
    %v201 = vld [vmem:[%s189 + $0x2c] sm:$0xf]
    %v202 = vld [vmem:[%s189 + $0x30] sm:$0xf]
    %v203 = vld [vmem:[%s189 + $0x34] sm:$0xf]
    %v204 = vld [vmem:[%s189 + $0x38] sm:$0xf]
    %v205 = vld [vmem:[%s189 + $0x3c] sm:$0xf]
    %s206 = scalar_lea.vmem %s2, 2
    %v207 = vld [vmem:[%s206] sm:$0x1]
    %v209 = vlaneseq
    %v210 = vshrl.u32 %v209, 7
    %v211 = vsub.s32 0, %v210
    %v212 = vrot.slane %v207, %v211
    %v230 = vunpack.c.l.b16 %v190
    %v231 = vunpack.c.l.b16 %v191
    %v232 = vunpack.c.l.b16 %v192
    %v233 = vunpack.c.l.b16 %v193
    %v234 = vunpack.c.l.b16 %v194
    %v235 = vunpack.c.l.b16 %v195
    %v236 = vunpack.c.l.b16 %v196
    %v237 = vunpack.c.l.b16 %v197
    %v238 = vunpack.c.l.b16 %v198
    %v239 = vunpack.c.l.b16 %v199
    %v240 = vunpack.c.l.b16 %v200
    %v241 = vunpack.c.l.b16 %v201
    %v242 = vunpack.c.l.b16 %v202
    %v243 = vunpack.c.l.b16 %v203
    %v244 = vunpack.c.l.b16 %v204
    %v245 = vunpack.c.l.b16 %v205
    %v246 = vpack.c.b16 %v231, %v230
    %v247 = vpack.c.b16 %v233, %v232
    %v248 = vpack.c.b16 %v235, %v234
    %v249 = vpack.c.b16 %v237, %v236
    %v250 = vpack.c.b16 %v239, %v238
    %v251 = vpack.c.b16 %v241, %v240
    %v252 = vpack.c.b16 %v243, %v242
    %v253 = vpack.c.b16 %v245, %v244
    %262 = vmatprep.subr.bf16.mxu0 0
    %263 = vmatpush1.bf16.msra.mxu0 %v253
    %264 = vmatprep.subr.bf16.mxu0 0
    %265 = vmatpush1.bf16.msra.mxu0 %v252
    %266 = vmatprep.subr.bf16.mxu0 0
    %267 = vmatpush1.bf16.msra.mxu0 %v251
    %268 = vmatprep.subr.bf16.mxu0 0
    %269 = vmatpush1.bf16.msra.mxu0 %v250
    %270 = vmatprep.subr.bf16.mxu0 0
    %271 = vmatpush1.bf16.msra.mxu0 %v249
    %272 = vmatprep.subr.bf16.mxu0 0
    %273 = vmatpush1.bf16.msra.mxu0 %v248
    %274 = vmatprep.subr.bf16.mxu0 0
    %275 = vmatpush1.bf16.msra.mxu0 %v247
    %276 = vmatprep.subr.bf16.mxu0 0
    %277 = vmatpush1.bf16.msra.mxu0 %v246
    %278 = vmatprep.subr.bf16.mxu0 0
    %279 = vmatpush2.bf16.msra.mxu0 0
    %280 = vmatprep.subr.bf16.mxu0 0
    %281 = vmatpush2.bf16.msra.mxu0 0
    %282 = vmatprep.subr.bf16.mxu0 0
    %283 = vmatpush2.bf16.msra.mxu0 0
    %284 = vmatprep.subr.bf16.mxu0 0
    %285 = vmatpush2.bf16.msra.mxu0 0
    %286 = vmatprep.subr.bf16.mxu0 0
    %287 = vmatpush2.bf16.msra.mxu0 0
    %288 = vmatprep.subr.bf16.mxu0 0
    %289 = vmatpush2.bf16.msra.mxu0 0
    %290 = vmatprep.subr.bf16.mxu0 0
    %291 = vmatpush2.bf16.msra.mxu0 0
    %292 = vmatprep.subr.bf16.mxu0 0
    %293 = vmatpush2.bf16.msra.mxu0 0
    %294 = vmatprep.mubr.bf16.mxu0 0
    %295 = vmatmul.mubr.bf16.gmra.mxu0 %v188
    %v296 = vpop.f32.mrf.mxu0
    %v297 = vadd.f32 %v212, %v296
    %v298 = vpop.f32.mrf.mxu0
    %v299 = vpop.f32.mrf.mxu0
    %v300 = vpop.f32.mrf.mxu0
    %301 = vdwg.mxu0
    %v302 = vmax.f32 %v297, 0.0
    %v303 = vpack.c.bf16 %v302, %v302
    %s304 = scalar_lea.vmem [#allocation2], 192
    %v305 = vld [vmem:[%s304] sm:$0xf]
    %v306 = vld [vmem:[%s304 + $0x4] sm:$0xf]
    %v307 = vld [vmem:[%s304 + $0x8] sm:$0xf]
    %v308 = vld [vmem:[%s304 + $0xc] sm:$0xf]
    %v309 = vld [vmem:[%s304 + $0x10] sm:$0xf]
    %v310 = vld [vmem:[%s304 + $0x14] sm:$0xf]
    %v311 = vld [vmem:[%s304 + $0x18] sm:$0xf]
    %v312 = vld [vmem:[%s304 + $0x1c] sm:$0xf]
    %v313 = vld [vmem:[%s304 + $0x20] sm:$0xf]
    %v314 = vld [vmem:[%s304 + $0x24] sm:$0xf]
    %v315 = vld [vmem:[%s304 + $0x28] sm:$0xf]
    %v316 = vld [vmem:[%s304 + $0x2c] sm:$0xf]
    %v317 = vld [vmem:[%s304 + $0x30] sm:$0xf]
    %v318 = vld [vmem:[%s304 + $0x34] sm:$0xf]
    %v319 = vld [vmem:[%s304 + $0x38] sm:$0xf]
    %v320 = vld [vmem:[%s304 + $0x3c] sm:$0xf]
    %s321 = scalar_lea.vmem %s2, 3
    %v322 = vld [vmem:[%s321] sm:$0x1]
    %v324 = vlaneseq
    %v325 = vshrl.u32 %v324, 7
    %v326 = vsub.s32 0, %v325
    %v327 = vrot.slane %v322, %v326
    %v345 = vunpack.c.l.b16 %v305
    %v346 = vunpack.c.l.b16 %v306
    %v347 = vunpack.c.l.b16 %v307
    %v348 = vunpack.c.l.b16 %v308
    %v349 = vunpack.c.l.b16 %v309
    %v350 = vunpack.c.l.b16 %v310
    %v351 = vunpack.c.l.b16 %v311
    %v352 = vunpack.c.l.b16 %v312
    %v353 = vunpack.c.l.b16 %v313
    %v354 = vunpack.c.l.b16 %v314
    %v355 = vunpack.c.l.b16 %v315
    %v356 = vunpack.c.l.b16 %v316
    %v357 = vunpack.c.l.b16 %v317
    %v358 = vunpack.c.l.b16 %v318
    %v359 = vunpack.c.l.b16 %v319
    %v360 = vunpack.c.l.b16 %v320
    %v361 = vpack.c.b16 %v346, %v345
    %v362 = vpack.c.b16 %v348, %v347
    %v363 = vpack.c.b16 %v350, %v349
    %v364 = vpack.c.b16 %v352, %v351
    %v365 = vpack.c.b16 %v354, %v353
    %v366 = vpack.c.b16 %v356, %v355
    %v367 = vpack.c.b16 %v358, %v357
    %v368 = vpack.c.b16 %v360, %v359
    %377 = vmatprep.subr.bf16.mxu0 0
    %378 = vmatpush1.bf16.msra.mxu0 %v368
    %379 = vmatprep.subr.bf16.mxu0 0
    %380 = vmatpush1.bf16.msra.mxu0 %v367
    %381 = vmatprep.subr.bf16.mxu0 0
    %382 = vmatpush1.bf16.msra.mxu0 %v366
    %383 = vmatprep.subr.bf16.mxu0 0
    %384 = vmatpush1.bf16.msra.mxu0 %v365
    %385 = vmatprep.subr.bf16.mxu0 0
    %386 = vmatpush1.bf16.msra.mxu0 %v364
    %387 = vmatprep.subr.bf16.mxu0 0
    %388 = vmatpush1.bf16.msra.mxu0 %v363
    %389 = vmatprep.subr.bf16.mxu0 0
    %390 = vmatpush1.bf16.msra.mxu0 %v362
    %391 = vmatprep.subr.bf16.mxu0 0
    %392 = vmatpush1.bf16.msra.mxu0 %v361
    %393 = vmatprep.subr.bf16.mxu0 0
    %394 = vmatpush2.bf16.msra.mxu0 0
    %395 = vmatprep.subr.bf16.mxu0 0
    %396 = vmatpush2.bf16.msra.mxu0 0
    %397 = vmatprep.subr.bf16.mxu0 0
    %398 = vmatpush2.bf16.msra.mxu0 0
    %399 = vmatprep.subr.bf16.mxu0 0
    %400 = vmatpush2.bf16.msra.mxu0 0
    %401 = vmatprep.subr.bf16.mxu0 0
    %402 = vmatpush2.bf16.msra.mxu0 0
    %403 = vmatprep.subr.bf16.mxu0 0
    %404 = vmatpush2.bf16.msra.mxu0 0
    %405 = vmatprep.subr.bf16.mxu0 0
    %406 = vmatpush2.bf16.msra.mxu0 0
    %407 = vmatprep.subr.bf16.mxu0 0
    %408 = vmatpush2.bf16.msra.mxu0 0
    %409 = vmatprep.mubr.bf16.mxu0 0
    %410 = vmatmul.mubr.bf16.gmra.mxu0 %v303
    %v411 = vpop.f32.mrf.mxu0
    %v412 = vadd.f32 %v327, %v411
    %v413 = vpop.f32.mrf.mxu0
    %v414 = vpop.f32.mrf.mxu0
    %v415 = vpop.f32.mrf.mxu0
    %416 = vdwg.mxu0
    %v417 = vmax.f32 %v412, 0.0
    %v418 = vpack.c.bf16 %v417, %v417
    %s419 = scalar_lea.vmem [#allocation2], 256
    %v420 = vld [vmem:[%s419] sm:$0xf]
    %v421 = vld [vmem:[%s419 + $0x4] sm:$0xf]
    %v422 = vld [vmem:[%s419 + $0x8] sm:$0xf]
    %v423 = vld [vmem:[%s419 + $0xc] sm:$0xf]
    %v424 = vld [vmem:[%s419 + $0x10] sm:$0xf]
    %v425 = vld [vmem:[%s419 + $0x14] sm:$0xf]
    %v426 = vld [vmem:[%s419 + $0x18] sm:$0xf]
    %v427 = vld [vmem:[%s419 + $0x1c] sm:$0xf]
    %v428 = vld [vmem:[%s419 + $0x20] sm:$0xf]
    %v429 = vld [vmem:[%s419 + $0x24] sm:$0xf]
    %v430 = vld [vmem:[%s419 + $0x28] sm:$0xf]
    %v431 = vld [vmem:[%s419 + $0x2c] sm:$0xf]
    %v432 = vld [vmem:[%s419 + $0x30] sm:$0xf]
    %v433 = vld [vmem:[%s419 + $0x34] sm:$0xf]
    %v434 = vld [vmem:[%s419 + $0x38] sm:$0xf]
    %v435 = vld [vmem:[%s419 + $0x3c] sm:$0xf]
    %s436 = scalar_lea.vmem %s2, 4
    %v437 = vld [vmem:[%s436] sm:$0x1]
    %v439 = vlaneseq
    %v440 = vshrl.u32 %v439, 7
    %v441 = vsub.s32 0, %v440
    %v442 = vrot.slane %v437, %v441
    %v460 = vunpack.c.l.b16 %v420
    %v461 = vunpack.c.l.b16 %v421
    %v462 = vunpack.c.l.b16 %v422
    %v463 = vunpack.c.l.b16 %v423
    %v464 = vunpack.c.l.b16 %v424
    %v465 = vunpack.c.l.b16 %v425
    %v466 = vunpack.c.l.b16 %v426
    %v467 = vunpack.c.l.b16 %v427
    %v468 = vunpack.c.l.b16 %v428
    %v469 = vunpack.c.l.b16 %v429
    %v470 = vunpack.c.l.b16 %v430
    %v471 = vunpack.c.l.b16 %v431
    %v472 = vunpack.c.l.b16 %v432
    %v473 = vunpack.c.l.b16 %v433
    %v474 = vunpack.c.l.b16 %v434
    %v475 = vunpack.c.l.b16 %v435
    %v476 = vpack.c.b16 %v461, %v460
    %v477 = vpack.c.b16 %v463, %v462
    %v478 = vpack.c.b16 %v465, %v464
    %v479 = vpack.c.b16 %v467, %v466
    %v480 = vpack.c.b16 %v469, %v468
    %v481 = vpack.c.b16 %v471, %v470
    %v482 = vpack.c.b16 %v473, %v472
    %v483 = vpack.c.b16 %v475, %v474
    %492 = vmatprep.subr.bf16.mxu0 0
    %493 = vmatpush1.bf16.msra.mxu0 %v483
    %494 = vmatprep.subr.bf16.mxu0 0
    %495 = vmatpush1.bf16.msra.mxu0 %v482
    %496 = vmatprep.subr.bf16.mxu0 0
    %497 = vmatpush1.bf16.msra.mxu0 %v481
    %498 = vmatprep.subr.bf16.mxu0 0
    %499 = vmatpush1.bf16.msra.mxu0 %v480
    %500 = vmatprep.subr.bf16.mxu0 0
    %501 = vmatpush1.bf16.msra.mxu0 %v479
    %502 = vmatprep.subr.bf16.mxu0 0
    %503 = vmatpush1.bf16.msra.mxu0 %v478
    %504 = vmatprep.subr.bf16.mxu0 0
    %505 = vmatpush1.bf16.msra.mxu0 %v477
    %506 = vmatprep.subr.bf16.mxu0 0
    %507 = vmatpush1.bf16.msra.mxu0 %v476
    %508 = vmatprep.subr.bf16.mxu0 0
    %509 = vmatpush2.bf16.msra.mxu0 0
    %510 = vmatprep.subr.bf16.mxu0 0
    %511 = vmatpush2.bf16.msra.mxu0 0
    %512 = vmatprep.subr.bf16.mxu0 0
    %513 = vmatpush2.bf16.msra.mxu0 0
    %514 = vmatprep.subr.bf16.mxu0 0
    %515 = vmatpush2.bf16.msra.mxu0 0
    %516 = vmatprep.subr.bf16.mxu0 0
    %517 = vmatpush2.bf16.msra.mxu0 0
    %518 = vmatprep.subr.bf16.mxu0 0
    %519 = vmatpush2.bf16.msra.mxu0 0
    %520 = vmatprep.subr.bf16.mxu0 0
    %521 = vmatpush2.bf16.msra.mxu0 0
    %522 = vmatprep.subr.bf16.mxu0 0
    %523 = vmatpush2.bf16.msra.mxu0 0
    %524 = vmatprep.mubr.bf16.mxu0 0
    %525 = vmatmul.mubr.bf16.gmra.mxu0 %v418
    %v526 = vpop.f32.mrf.mxu0
    %v527 = vadd.f32 %v442, %v526
    %v528 = vpop.f32.mrf.mxu0
    %v529 = vpop.f32.mrf.mxu0
    %v530 = vpop.f32.mrf.mxu0
    %531 = vdwg.mxu0
    %v532 = vmax.f32 %v527, 0.0
    %v533 = vpack.c.bf16 %v532, %v532
    %s534 = scalar_lea.vmem [#allocation2], 320
    %v535 = vld [vmem:[%s534] sm:$0xf]
    %v536 = vld [vmem:[%s534 + $0x4] sm:$0xf]
    %v537 = vld [vmem:[%s534 + $0x8] sm:$0xf]
    %v538 = vld [vmem:[%s534 + $0xc] sm:$0xf]
    %v539 = vld [vmem:[%s534 + $0x10] sm:$0xf]
    %v540 = vld [vmem:[%s534 + $0x14] sm:$0xf]
    %v541 = vld [vmem:[%s534 + $0x18] sm:$0xf]
    %v542 = vld [vmem:[%s534 + $0x1c] sm:$0xf]
    %v543 = vld [vmem:[%s534 + $0x20] sm:$0xf]
    %v544 = vld [vmem:[%s534 + $0x24] sm:$0xf]
    %v545 = vld [vmem:[%s534 + $0x28] sm:$0xf]
    %v546 = vld [vmem:[%s534 + $0x2c] sm:$0xf]
    %v547 = vld [vmem:[%s534 + $0x30] sm:$0xf]
    %v548 = vld [vmem:[%s534 + $0x34] sm:$0xf]
    %v549 = vld [vmem:[%s534 + $0x38] sm:$0xf]
    %v550 = vld [vmem:[%s534 + $0x3c] sm:$0xf]
    %s551 = scalar_lea.vmem %s2, 5
    %v552 = vld [vmem:[%s551] sm:$0x1]
    %v554 = vlaneseq
    %v555 = vshrl.u32 %v554, 7
    %v556 = vsub.s32 0, %v555
    %v557 = vrot.slane %v552, %v556
    %v575 = vunpack.c.l.b16 %v535
    %v576 = vunpack.c.l.b16 %v536
    %v577 = vunpack.c.l.b16 %v537
    %v578 = vunpack.c.l.b16 %v538
    %v579 = vunpack.c.l.b16 %v539
    %v580 = vunpack.c.l.b16 %v540
    %v581 = vunpack.c.l.b16 %v541
    %v582 = vunpack.c.l.b16 %v542
    %v583 = vunpack.c.l.b16 %v543
    %v584 = vunpack.c.l.b16 %v544
    %v585 = vunpack.c.l.b16 %v545
    %v586 = vunpack.c.l.b16 %v546
    %v587 = vunpack.c.l.b16 %v547
    %v588 = vunpack.c.l.b16 %v548
    %v589 = vunpack.c.l.b16 %v549
    %v590 = vunpack.c.l.b16 %v550
    %v591 = vpack.c.b16 %v576, %v575
    %v592 = vpack.c.b16 %v578, %v577
    %v593 = vpack.c.b16 %v580, %v579
    %v594 = vpack.c.b16 %v582, %v581
    %v595 = vpack.c.b16 %v584, %v583
    %v596 = vpack.c.b16 %v586, %v585
    %v597 = vpack.c.b16 %v588, %v587
    %v598 = vpack.c.b16 %v590, %v589
    %607 = vmatprep.subr.bf16.mxu0 0
    %608 = vmatpush1.bf16.msra.mxu0 %v598
    %609 = vmatprep.subr.bf16.mxu0 0
    %610 = vmatpush1.bf16.msra.mxu0 %v597
    %611 = vmatprep.subr.bf16.mxu0 0
    %612 = vmatpush1.bf16.msra.mxu0 %v596
    %613 = vmatprep.subr.bf16.mxu0 0
    %614 = vmatpush1.bf16.msra.mxu0 %v595
    %615 = vmatprep.subr.bf16.mxu0 0
    %616 = vmatpush1.bf16.msra.mxu0 %v594
    %617 = vmatprep.subr.bf16.mxu0 0
    %618 = vmatpush1.bf16.msra.mxu0 %v593
    %619 = vmatprep.subr.bf16.mxu0 0
    %620 = vmatpush1.bf16.msra.mxu0 %v592
    %621 = vmatprep.subr.bf16.mxu0 0
    %622 = vmatpush1.bf16.msra.mxu0 %v591
    %623 = vmatprep.subr.bf16.mxu0 0
    %624 = vmatpush2.bf16.msra.mxu0 0
    %625 = vmatprep.subr.bf16.mxu0 0
    %626 = vmatpush2.bf16.msra.mxu0 0
    %627 = vmatprep.subr.bf16.mxu0 0
    %628 = vmatpush2.bf16.msra.mxu0 0
    %629 = vmatprep.subr.bf16.mxu0 0
    %630 = vmatpush2.bf16.msra.mxu0 0
    %631 = vmatprep.subr.bf16.mxu0 0
    %632 = vmatpush2.bf16.msra.mxu0 0
    %633 = vmatprep.subr.bf16.mxu0 0
    %634 = vmatpush2.bf16.msra.mxu0 0
    %635 = vmatprep.subr.bf16.mxu0 0
    %636 = vmatpush2.bf16.msra.mxu0 0
    %637 = vmatprep.subr.bf16.mxu0 0
    %638 = vmatpush2.bf16.msra.mxu0 0
    %639 = vmatprep.mubr.bf16.mxu0 0
    %640 = vmatmul.mubr.bf16.gmra.mxu0 %v533
    %v641 = vpop.f32.mrf.mxu0
    %v642 = vadd.f32 %v557, %v641
    %v643 = vpop.f32.mrf.mxu0
    %v644 = vpop.f32.mrf.mxu0
    %v645 = vpop.f32.mrf.mxu0
    %646 = vdwg.mxu0
    %v647 = vmax.f32 %v642, 0.0
    %v648 = vpack.c.bf16 %v647, %v647
    %s649 = scalar_lea.vmem [#allocation2], 384
    %v650 = vld [vmem:[%s649] sm:$0xf]
    %v651 = vld [vmem:[%s649 + $0x4] sm:$0xf]
    %v652 = vld [vmem:[%s649 + $0x8] sm:$0xf]
    %v653 = vld [vmem:[%s649 + $0xc] sm:$0xf]
    %v654 = vld [vmem:[%s649 + $0x10] sm:$0xf]
    %v655 = vld [vmem:[%s649 + $0x14] sm:$0xf]
    %v656 = vld [vmem:[%s649 + $0x18] sm:$0xf]
    %v657 = vld [vmem:[%s649 + $0x1c] sm:$0xf]
    %v658 = vld [vmem:[%s649 + $0x20] sm:$0xf]
    %v659 = vld [vmem:[%s649 + $0x24] sm:$0xf]
    %v660 = vld [vmem:[%s649 + $0x28] sm:$0xf]
    %v661 = vld [vmem:[%s649 + $0x2c] sm:$0xf]
    %v662 = vld [vmem:[%s649 + $0x30] sm:$0xf]
    %v663 = vld [vmem:[%s649 + $0x34] sm:$0xf]
    %v664 = vld [vmem:[%s649 + $0x38] sm:$0xf]
    %v665 = vld [vmem:[%s649 + $0x3c] sm:$0xf]
    %s666 = scalar_lea.vmem %s2, 6
    %v667 = vld [vmem:[%s666] sm:$0x1]
    %v669 = vlaneseq
    %v670 = vshrl.u32 %v669, 7
    %v671 = vsub.s32 0, %v670
    %v672 = vrot.slane %v667, %v671
    %v690 = vunpack.c.l.b16 %v650
    %v691 = vunpack.c.l.b16 %v651
    %v692 = vunpack.c.l.b16 %v652
    %v693 = vunpack.c.l.b16 %v653
    %v694 = vunpack.c.l.b16 %v654
    %v695 = vunpack.c.l.b16 %v655
    %v696 = vunpack.c.l.b16 %v656
    %v697 = vunpack.c.l.b16 %v657
    %v698 = vunpack.c.l.b16 %v658
    %v699 = vunpack.c.l.b16 %v659
    %v700 = vunpack.c.l.b16 %v660
    %v701 = vunpack.c.l.b16 %v661
    %v702 = vunpack.c.l.b16 %v662
    %v703 = vunpack.c.l.b16 %v663
    %v704 = vunpack.c.l.b16 %v664
    %v705 = vunpack.c.l.b16 %v665
    %v706 = vpack.c.b16 %v691, %v690
    %v707 = vpack.c.b16 %v693, %v692
    %v708 = vpack.c.b16 %v695, %v694
    %v709 = vpack.c.b16 %v697, %v696
    %v710 = vpack.c.b16 %v699, %v698
    %v711 = vpack.c.b16 %v701, %v700
    %v712 = vpack.c.b16 %v703, %v702
    %v713 = vpack.c.b16 %v705, %v704
    %722 = vmatprep.subr.bf16.mxu0 0
    %723 = vmatpush1.bf16.msra.mxu0 %v713
    %724 = vmatprep.subr.bf16.mxu0 0
    %725 = vmatpush1.bf16.msra.mxu0 %v712
    %726 = vmatprep.subr.bf16.mxu0 0
    %727 = vmatpush1.bf16.msra.mxu0 %v711
    %728 = vmatprep.subr.bf16.mxu0 0
    %729 = vmatpush1.bf16.msra.mxu0 %v710
    %730 = vmatprep.subr.bf16.mxu0 0
    %731 = vmatpush1.bf16.msra.mxu0 %v709
    %732 = vmatprep.subr.bf16.mxu0 0
    %733 = vmatpush1.bf16.msra.mxu0 %v708
    %734 = vmatprep.subr.bf16.mxu0 0
    %735 = vmatpush1.bf16.msra.mxu0 %v707
    %736 = vmatprep.subr.bf16.mxu0 0
    %737 = vmatpush1.bf16.msra.mxu0 %v706
    %738 = vmatprep.subr.bf16.mxu0 0
    %739 = vmatpush2.bf16.msra.mxu0 0
    %740 = vmatprep.subr.bf16.mxu0 0
    %741 = vmatpush2.bf16.msra.mxu0 0
    %742 = vmatprep.subr.bf16.mxu0 0
    %743 = vmatpush2.bf16.msra.mxu0 0
    %744 = vmatprep.subr.bf16.mxu0 0
    %745 = vmatpush2.bf16.msra.mxu0 0
    %746 = vmatprep.subr.bf16.mxu0 0
    %747 = vmatpush2.bf16.msra.mxu0 0
    %748 = vmatprep.subr.bf16.mxu0 0
    %749 = vmatpush2.bf16.msra.mxu0 0
    %750 = vmatprep.subr.bf16.mxu0 0
    %751 = vmatpush2.bf16.msra.mxu0 0
    %752 = vmatprep.subr.bf16.mxu0 0
    %753 = vmatpush2.bf16.msra.mxu0 0
    %754 = vmatprep.mubr.bf16.mxu0 0
    %755 = vmatmul.mubr.bf16.gmra.mxu0 %v648
    %v756 = vpop.f32.mrf.mxu0
    %v757 = vadd.f32 %v672, %v756
    %v758 = vpop.f32.mrf.mxu0
    %v759 = vpop.f32.mrf.mxu0
    %v760 = vpop.f32.mrf.mxu0
    %761 = vdwg.mxu0
    %v762 = vmax.f32 %v757, 0.0
    %v763 = vpack.c.bf16 %v762, %v762
    %s764 = scalar_lea.vmem [#allocation2], 448
    %v765 = vld [vmem:[%s764] sm:$0xf]
    %v766 = vld [vmem:[%s764 + $0x4] sm:$0xf]
    %v767 = vld [vmem:[%s764 + $0x8] sm:$0xf]
    %v768 = vld [vmem:[%s764 + $0xc] sm:$0xf]
    %v769 = vld [vmem:[%s764 + $0x10] sm:$0xf]
    %v770 = vld [vmem:[%s764 + $0x14] sm:$0xf]
    %v771 = vld [vmem:[%s764 + $0x18] sm:$0xf]
    %v772 = vld [vmem:[%s764 + $0x1c] sm:$0xf]
    %v773 = vld [vmem:[%s764 + $0x20] sm:$0xf]
    %v774 = vld [vmem:[%s764 + $0x24] sm:$0xf]
    %v775 = vld [vmem:[%s764 + $0x28] sm:$0xf]
    %v776 = vld [vmem:[%s764 + $0x2c] sm:$0xf]
    %v777 = vld [vmem:[%s764 + $0x30] sm:$0xf]
    %v778 = vld [vmem:[%s764 + $0x34] sm:$0xf]
    %v779 = vld [vmem:[%s764 + $0x38] sm:$0xf]
    %v780 = vld [vmem:[%s764 + $0x3c] sm:$0xf]
    %s781 = scalar_lea.vmem %s2, 7
    %v782 = vld [vmem:[%s781] sm:$0x1]
    %v784 = vlaneseq
    %v785 = vshrl.u32 %v784, 7
    %v786 = vsub.s32 0, %v785
    %v787 = vrot.slane %v782, %v786
    %v805 = vunpack.c.l.b16 %v765
    %v806 = vunpack.c.l.b16 %v766
    %v807 = vunpack.c.l.b16 %v767
    %v808 = vunpack.c.l.b16 %v768
    %v809 = vunpack.c.l.b16 %v769
    %v810 = vunpack.c.l.b16 %v770
    %v811 = vunpack.c.l.b16 %v771
    %v812 = vunpack.c.l.b16 %v772
    %v813 = vunpack.c.l.b16 %v773
    %v814 = vunpack.c.l.b16 %v774
    %v815 = vunpack.c.l.b16 %v775
    %v816 = vunpack.c.l.b16 %v776
    %v817 = vunpack.c.l.b16 %v777
    %v818 = vunpack.c.l.b16 %v778
    %v819 = vunpack.c.l.b16 %v779
    %v820 = vunpack.c.l.b16 %v780
    %v821 = vpack.c.b16 %v806, %v805
    %v822 = vpack.c.b16 %v808, %v807
    %v823 = vpack.c.b16 %v810, %v809
    %v824 = vpack.c.b16 %v812, %v811
    %v825 = vpack.c.b16 %v814, %v813
    %v826 = vpack.c.b16 %v816, %v815
    %v827 = vpack.c.b16 %v818, %v817
    %v828 = vpack.c.b16 %v820, %v819
    %837 = vmatprep.subr.bf16.mxu0 0
    %838 = vmatpush1.bf16.msra.mxu0 %v828
    %839 = vmatprep.subr.bf16.mxu0 0
    %840 = vmatpush1.bf16.msra.mxu0 %v827
    %841 = vmatprep.subr.bf16.mxu0 0
    %842 = vmatpush1.bf16.msra.mxu0 %v826
    %843 = vmatprep.subr.bf16.mxu0 0
    %844 = vmatpush1.bf16.msra.mxu0 %v825
    %845 = vmatprep.subr.bf16.mxu0 0
    %846 = vmatpush1.bf16.msra.mxu0 %v824
    %847 = vmatprep.subr.bf16.mxu0 0
    %848 = vmatpush1.bf16.msra.mxu0 %v823
    %849 = vmatprep.subr.bf16.mxu0 0
    %850 = vmatpush1.bf16.msra.mxu0 %v822
    %851 = vmatprep.subr.bf16.mxu0 0
    %852 = vmatpush1.bf16.msra.mxu0 %v821
    %853 = vmatprep.subr.bf16.mxu0 0
    %854 = vmatpush2.bf16.msra.mxu0 0
    %855 = vmatprep.subr.bf16.mxu0 0
    %856 = vmatpush2.bf16.msra.mxu0 0
    %857 = vmatprep.subr.bf16.mxu0 0
    %858 = vmatpush2.bf16.msra.mxu0 0
    %859 = vmatprep.subr.bf16.mxu0 0
    %860 = vmatpush2.bf16.msra.mxu0 0
    %861 = vmatprep.subr.bf16.mxu0 0
    %862 = vmatpush2.bf16.msra.mxu0 0
    %863 = vmatprep.subr.bf16.mxu0 0
    %864 = vmatpush2.bf16.msra.mxu0 0
    %865 = vmatprep.subr.bf16.mxu0 0
    %866 = vmatpush2.bf16.msra.mxu0 0
    %867 = vmatprep.subr.bf16.mxu0 0
    %868 = vmatpush2.bf16.msra.mxu0 0
    %869 = vmatprep.mubr.bf16.mxu0 0
    %870 = vmatmul.mubr.bf16.gmra.mxu0 %v763
    %v871 = vpop.f32.mrf.mxu0
    %v872 = vadd.f32 %v787, %v871
    %v873 = vpop.f32.mrf.mxu0
    %v874 = vpop.f32.mrf.mxu0
    %v875 = vpop.f32.mrf.mxu0
    %876 = vdwg.mxu0
    %vm877 = vcmask 23552
    %878 = vst.msk [vmem:[%s3] sm:$0xff] %vm877, %v872
    // Predicated region
    $region18: #{tpu_custom_call.1} parent=1 // pred_check
      _
    $region19: #{tpu_custom_call.1} parent=1 // pred_check_branch
      %880 = sbr.rel (0) target = $region21
    $region20: #{tpu_custom_call.1} parent=1 // pred_region
      _
    $region21: #{tpu_custom_call.1} parent=1 // pred_fallthru
      _
    // Predicated region
    $region22: #{tpu_custom_call.1} parent=1 // pred_check
      _
    $region23: #{tpu_custom_call.1} parent=1 // pred_check_branch
      %882 = sbr.rel (0) target = $region25
    $region24: #{tpu_custom_call.1} parent=1 // pred_region
      _
    $region25: #{tpu_custom_call.1} parent=1 // pred_fallthru
      _
    %883 = vsyncpa [#allocation3], 1

</llo_original>
